<compile_context>
chip_gen: v6e
topology: v6e:2x2x1
jax: 0.10.0
libtpu: 0.0.40
codegen_flags: <defaults>
</compile_context>

<pallas_src>
import math

import jax
import jax.numpy as jnp
from jax import lax
from jax.experimental import pallas as pl
from jax.experimental.pallas import tpu as pltpu


# ----------------------------------------------------------------------------
# Parameter preparation (runs once per layer, outside the hot path).
# ----------------------------------------------------------------------------
def _kac_walk_matrix(dim, seed, n_steps):
    """Compose n_steps deterministic Givens rotations into M s.t. walk(X) == X @ M."""
    key = jax.random.PRNGKey(seed)
    ki, ko, kt = jax.random.split(key, 3)
    i_idx = jax.random.randint(ki, (n_steps,), 0, dim)
    off = jax.random.randint(ko, (n_steps,), 1, dim)
    j_idx = (i_idx + off) % dim                      # guarantees i != j
    theta = jax.random.uniform(kt, (n_steps,), minval=0.0, maxval=2.0 * jnp.pi)
    c = jnp.cos(theta)
    s = jnp.sin(theta)

    def body(t, m):
        i, j = i_idx[t], j_idx[t]
        col_i = m[:, i]
        col_j = m[:, j]
        m = m.at[:, i].set(c[t] * col_i + s[t] * col_j)
        m = m.at[:, j].set(-s[t] * col_i + c[t] * col_j)
        return m

    return lax.fori_loop(0, n_steps, body, jnp.eye(dim, dtype=jnp.float32))


def _fold_params(w, b, vec, m1, m2, *, group, mxu_dtype):
    """Fold the frozen Linear + both Kac walks + vec into one affine map.

    out = x @ combined + bias, with combined = W^T + (M1 * vec) @ M2.
    If group > 1, `group` consecutive rows of x are packed into one lane-dense row,
    so the weight becomes block-diagonal kron(I_group, combined) and the bias tiles.
    """
    combined = (w.T.astype(jnp.float32)
                + (m1.astype(jnp.float32) * vec.astype(jnp.float32)[None, :])
                @ m2.astype(jnp.float32))
    bias = b.astype(jnp.float32)
    if group > 1:
        combined = jnp.kron(jnp.eye(group, dtype=jnp.float32), combined)
        bias = jnp.tile(bias, group)
    return combined.astype(mxu_dtype), bias.reshape(1, -1)


# ----------------------------------------------------------------------------
# Device introspection helpers.
# ----------------------------------------------------------------------------
def _vmem_capacity_bytes():
    try:
        return int(pltpu.get_tpu_info().vmem_capacity_bytes)
    except Exception:
        return 64 << 20          # conservative (v7x per-TC size)


def _device_kind():
    try:
        return jax.devices()[0].device_kind.lower()
    except Exception:
        return ""


# ----------------------------------------------------------------------------
# Pallas kernel: one (tm, gd) x (gd, tn) matmul tile + f32 bias epilogue.
# ----------------------------------------------------------------------------
def _kac_fused_kernel(x_ref, w_ref, b_ref, o_ref):
    # Feed the MXU in the (possibly low-precision) weight dtype; accumulate in f32.
    x = x_ref[...].astype(w_ref.dtype)
    acc = jnp.dot(x, w_ref[...], preferred_element_type=jnp.float32)   # MXU
    # f32 epilogue (bias add + cast) on the VPU (v5e-friendly: no bf16 VPU needed).
    o_ref[...] = (acc + b_ref[...]).astype(o_ref.dtype)


# ----------------------------------------------------------------------------
# Wrapper: layout decisions (packing, tiling, buffering) + pallas_call.
# ----------------------------------------------------------------------------
def kac_layer_forward(x, w, b, vec, m1, m2, *, mxu_dtype=None, block_rows=None):
    """Fused KacLayer forward.

    x: (..., dim); w: (dim, dim) PyTorch Linear weight; b, vec: (dim,);
    m1, m2: (dim, dim) composed Kac-walk rotation matrices.
    """
    orig_shape = x.shape
    dim = orig_shape[-1]
    n = math.prod(orig_shape[:-1])

    kind = _device_kind()
    is_v5e = ("v5 lite" in kind) or ("v5e" in kind) or ("v5litepod" in kind)
    capacity = _vmem_capacity_bytes()

    # ---- Lane packing: make loads/stores lane-dense.  Target 256 lanes on
    # v6e/v7x (2x256x256 MXU), 128 on v5e (4x128x128 MXU).
    target_lanes = 128 if is_v5e else 256
    group = 1
    if dim < 128:
        for tgt in (target_lanes, 128):
            if tgt % dim == 0:
                group = tgt // dim
                break
    # TODO(synk): dims that do not divide 128 fall back to lane-sparse (masked) stores.
    gd = group * dim

    x2d = x.reshape(n, dim)
    n_pad = (-n) % group
    if n_pad:
        # Pad the row count so packing always succeeds; trimmed after the kernel.
        x2d = jnp.pad(x2d, ((0, n_pad), (0, 0)))
    n_rows = (n + n_pad) // group
    x2d = x2d.reshape(n_rows, gd)                    # native dtype; cast in-kernel

    if mxu_dtype is None:
        # Keep the folded weight in f32 for small dims so a tiny adapter term
        # ((M1*vec)@M2, starts near zero) is not rounded away inside bf16.
        mxu_dtype = jnp.float32 if gd <= 512 else jnp.bfloat16

    w_g, b_g = _fold_params(w, b, vec, m1, m2, group=group, mxu_dtype=mxu_dtype)

    w_bytes = jnp.dtype(mxu_dtype).itemsize
    x_bytes = jnp.dtype(x.dtype).itemsize
    out_bytes = x_bytes

    # ---- Column tiling: keep the full (gd, gd) weight resident only when small;
    # otherwise stream (gd, tn) column blocks through the pipeline.
    if gd * gd * w_bytes <= capacity // 4:
        tn = gd
    elif gd % 256 == 0:
        tn = 256
    elif gd % 128 == 0:
        tn = 128
    else:
        tn = gd   # TODO(synk): add N/K tiling for huge dims that are not 128-multiples.
    n_col_tiles = pl.cdiv(gd, tn)
    invariant_weight = (n_col_tiles == 1)

    weight_bufs = 1 if invariant_weight else 2       # Buffered(1) when invariant
    weight_res = weight_bufs * gd * tn * w_bytes
    bias_res = weight_bufs * tn * 4

    # ---- Device-aware row tile: double-buffered x + out under a per-gen budget.
    tile_budget = (8 << 20) if is_v5e else min(capacity // 2, 64 << 20)
    tile_budget = min(tile_budget, int(capacity * 0.9) - weight_res - bias_res)
    tile_budget = max(tile_budget, 1 << 20)
    per_row = 2 * (gd * x_bytes + tn * out_bytes)
    tm_cap = max(8, min(4096, (tile_budget // per_row) // 8 * 8))
    if block_rows is not None:
        tm_cap = min(tm_cap, max(8, (block_rows // 8) * 8))

    if n_rows <= tm_cap:
        if n_rows >= 16:
            # Never a single row tile: split so both v7x TensorCores get work
            # and software pipelining is active.
            tm = min(n_rows, ((pl.cdiv(n_rows, 2) + 7) // 8) * 8)
        else:
            tm = n_rows                              # full-array block (tiny inputs)
    else:
        tm = tm_cap
    n_row_tiles = pl.cdiv(n_rows, tm)
    grid = (n_row_tiles, n_col_tiles)

    usage = weight_res + bias_res + 2 * tm * gd * x_bytes + 2 * tm * tn * out_bytes
    vmem_limit = int(min(capacity - (1 << 20), usage + (4 << 20)))
    vmem_limit = max(vmem_limit, 16 << 20)

    cost = pl.CostEstimate(
        flops=2 * n_rows * gd * gd,
        bytes_accessed=n_rows * gd * (x_bytes + out_bytes) + gd * gd * w_bytes + gd * 4,
        transcendentals=0)

    def _call(single_buffer_invariant):
        inv_kwargs = {}
        if single_buffer_invariant:
            inv_kwargs = dict(pipeline_mode=pl.Buffered(1))
        in_specs = [
            pl.BlockSpec((tm, gd), lambda i, j: (i, 0)),               # x row tile
            pl.BlockSpec((gd, tn), lambda i, j: (0, j), **inv_kwargs),  # folded W
            pl.BlockSpec((1, tn), lambda i, j: (0, j), **inv_kwargs),   # folded bias
        ]
        return pl.pallas_call(
            _kac_fused_kernel,
            out_shape=jax.ShapeDtypeStruct((n_rows, gd), x.dtype),
            grid=grid,
            in_specs=in_specs,
            out_specs=pl.BlockSpec((tm, tn), lambda i, j: (i, j)),
            compiler_params=pltpu.CompilerParams(
                dimension_semantics=("parallel", "parallel"),
                vmem_limit_bytes=vmem_limit),
            cost_estimate=cost,
        )(x2d, w_g, b_g)

    try:
        out2d = _call(invariant_weight)
    except Exception:
        # Fallback in case single-buffering of invariant operands is rejected.
        out2d = _call(False)

    out2d = out2d.reshape(n + n_pad, dim)
    if n_pad:
        out2d = out2d[:n]
    return out2d.reshape(orig_shape)


# ----------------------------------------------------------------------------
# Plain-JAX reference matching the PyTorch module's forward (all f32).
# ----------------------------------------------------------------------------
def _reference(x, w, b, vec, m1, m2):
    dim = x.shape[-1]
    x2d = x.reshape(-1, dim).astype(jnp.float32)
    y = x2d @ w.T.astype(jnp.float32) + b.astype(jnp.float32)
    yp = ((x2d @ m1) * vec.astype(jnp.float32)) @ m2
    return (y + yp).reshape(x.shape).astype(x.dtype)


if __name__ == "__main__":
    def run_case(batch, seq, dim, *, block_rows, mxu_dtype, tol):
        seed = 2024
        n_steps = math.ceil(math.log2(dim) * 0.3) * dim   # same formula as the module

        key = jax.random.PRNGKey(0)
        kx, kw, kb, kv = jax.random.split(key, 4)
        x = jax.random.normal(kx, (batch, seq, dim), dtype=jnp.float32)
        w = jax.random.normal(kw, (dim, dim), dtype=jnp.float32) / math.sqrt(dim)
        b = 0.1 * jax.random.normal(kb, (dim,), dtype=jnp.float32)
        # NOTE: the PyTorch module initializes `vec` to zeros (trainable adapter);
        # nonzero values here so the Kac path is actually exercised.
        vec = jax.random.normal(kv, (dim,), dtype=jnp.float32) / math.sqrt(dim)

        # Precompute the two seeded Kac-walk rotation matrices (parameter setup).
        m1 = _kac_walk_matrix(dim, seed * 2, n_steps)
        m2 = _kac_walk_matrix(dim, seed * 2 + 1, n_steps)

        out = kac_layer_forward(x, w, b, vec, m1, m2,
                                block_rows=block_rows, mxu_dtype=mxu_dtype)
        out = jax.block_until_ready(out)
        ref = _reference(x, w, b, vec, m1, m2)

        assert out.shape == x.shape and out.dtype == x.dtype
        max_err = float(jnp.max(jnp.abs(out.astype(jnp.float32) - ref)))
        assert jnp.allclose(out, ref, atol=tol, rtol=tol), max_err

    # 1) Small shapes from the module, exact f32 MXU feed:
    #    verifies the algebraic fold (W^T + (M1*vec)@M2) and the lane packing.
    run_case(2, 8, 32, block_rows=None, mxu_dtype=jnp.float32, tol=1e-4)

    # 2) Larger row count, forced row tiling (multi-tile grid) + bf16 MXU feed:
    #    exercises the pipelined / megacore-parallel path.
    run_case(2, 512, 32, block_rows=64, mxu_dtype=jnp.bfloat16, tol=5e-2)

    # 3) Row count not a multiple of the packing group + fully automatic
    #    (device-derived) tiling and dtype selection: exercises the pad/trim path.
    run_case(3, 5, 32, block_rows=None, mxu_dtype=None, tol=1e-4)

    print("KERNEL_OK")
</pallas_src>

<mosaic_0001>
module attributes {stable_mosaic.version = 11 : i64} {
  func.func @_kac_fused_kernel(%arg0: i32, %arg1: i32, %arg2: memref<2x256xf32, #tpu.memory_space<vmem>>, %arg3: memref<256x256xf32, #tpu.memory_space<vmem>>, %arg4: memref<1x256xf32, #tpu.memory_space<vmem>>, %arg5: memref<2x256xf32, #tpu.memory_space<vmem>>) attributes {dimension_semantics = [#tpu.dimension_semantics<parallel>, #tpu.dimension_semantics<parallel>], iteration_bounds = array<i64: 1, 1>, scalar_prefetch = 0 : i64, scratch_operands = 0 : i64, tpu.core_type = #tpu.core_type<tc>, window_params = [{transform_indices = @transform_0, window_bounds = array<i64: 2, 256>}, {pipeline_mode = #tpu.pipeline_mode<synchronous>, transform_indices = @transform_1, window_bounds = array<i64: 256, 256>}, {pipeline_mode = #tpu.pipeline_mode<synchronous>, transform_indices = @transform_2, window_bounds = array<i64: 1, 256>}, {transform_indices = @transform_3, window_bounds = array<i64: 2, 256>}]} {
    %c0 = arith.constant 0 : index
    %c0_0 = arith.constant 0 : index
    %0 = vector.load %arg2[%c0, %c0_0] : memref<2x256xf32, #tpu.memory_space<vmem>>, vector<2x256xf32>
    %c0_1 = arith.constant 0 : index
    %c0_2 = arith.constant 0 : index
    %1 = vector.load %arg3[%c0_1, %c0_2] : memref<256x256xf32, #tpu.memory_space<vmem>>, vector<256x256xf32>
    %cst = arith.constant dense<0.000000e+00> : vector<2x256xf32>
    %2 = tpu.matmul %0, %1, %cst {dimension_numbers = #tpu.dot_dimension_numbers<[1], [0], [0], [1], [0, 0, 1, 1], [], []>} : vector<2x256xf32>, vector<256x256xf32>, vector<2x256xf32> -> vector<2x256xf32>
    %c0_3 = arith.constant 0 : index
    %c0_4 = arith.constant 0 : index
    %3 = vector.load %arg4[%c0_3, %c0_4] : memref<1x256xf32, #tpu.memory_space<vmem>>, vector<1x256xf32>
    %4 = vector.broadcast %3 : vector<1x256xf32> to vector<2x256xf32>
    %5 = arith.addf %2, %4 : vector<2x256xf32>
    %c0_5 = arith.constant 0 : index
    %c0_6 = arith.constant 0 : index
    %6 = vector.load %arg5[%c0_5, %c0_6] : memref<2x256xf32, #tpu.memory_space<vmem>>, vector<2x256xf32>
    tpu.vector_store %arg5[%c0_5, %c0_6], %5 {strides = array<i32>} : memref<2x256xf32, #tpu.memory_space<vmem>>, vector<2x256xf32>,
    return
  }
  func.func @transform_0(%arg0: i32, %arg1: i32) -> (i32, i32) {
    %c0_i32 = arith.constant 0 : i32
    %c0_i32_0 = arith.constant 0 : i32
    return %arg0, %c0_i32 : i32, i32
  }
  func.func @transform_1(%arg0: i32, %arg1: i32) -> (i32, i32) {
    %c0_i32 = arith.constant 0 : i32
    %c0_i32_0 = arith.constant 0 : i32
    return %c0_i32, %arg1 : i32, i32
  }
  func.func @transform_2(%arg0: i32, %arg1: i32) -> (i32, i32) {
    %c0_i32 = arith.constant 0 : i32
    %c0_i32_0 = arith.constant 0 : i32
    return %c0_i32, %arg1 : i32, i32
  }
  func.func @transform_3(%arg0: i32, %arg1: i32) -> (i32, i32) {
    %c0_i32 = arith.constant 0 : i32
    return %arg0, %arg1 : i32, i32
  }
}

module attributes {stable_mosaic.version = 11 : i64} {
  func.func @_kac_fused_kernel(%arg0: i32, %arg1: i32, %arg2: memref<2x256xf32, #tpu.memory_space<vmem>>, %arg3: memref<256x256xf32, #tpu.memory_space<vmem>>, %arg4: memref<1x256xf32, #tpu.memory_space<vmem>>, %arg5: memref<2x256xf32, #tpu.memory_space<vmem>>) attributes {dimension_semantics = [#tpu.dimension_semantics<parallel>, #tpu.dimension_semantics<parallel>], iteration_bounds = array<i64: 1, 1>, scalar_prefetch = 0 : i64, scratch_operands = 0 : i64, tpu.core_type = #tpu.core_type<tc>, window_params = [{transform_indices = @transform_0, window_bounds = array<i64: 2, 256>}, {transform_indices = @transform_1, window_bounds = array<i64: 256, 256>}, {transform_indices = @transform_2, window_bounds = array<i64: 1, 256>}, {transform_indices = @transform_3, window_bounds = array<i64: 2, 256>}]} {
    %c0 = arith.constant 0 : index
    %c0_0 = arith.constant 0 : index
    %0 = vector.load %arg2[%c0, %c0_0] : memref<2x256xf32, #tpu.memory_space<vmem>>, vector<2x256xf32>
    %c0_1 = arith.constant 0 : index
    %c0_2 = arith.constant 0 : index
    %1 = vector.load %arg3[%c0_1, %c0_2] : memref<256x256xf32, #tpu.memory_space<vmem>>, vector<256x256xf32>
    %cst = arith.constant dense<0.000000e+00> : vector<2x256xf32>
    %2 = tpu.matmul %0, %1, %cst {dimension_numbers = #tpu.dot_dimension_numbers<[1], [0], [0], [1], [0, 0, 1, 1], [], []>} : vector<2x256xf32>, vector<256x256xf32>, vector<2x256xf32> -> vector<2x256xf32>
    %c0_3 = arith.constant 0 : index
    %c0_4 = arith.constant 0 : index
    %3 = vector.load %arg4[%c0_3, %c0_4] : memref<1x256xf32, #tpu.memory_space<vmem>>, vector<1x256xf32>
    %4 = vector.broadcast %3 : vector<1x256xf32> to vector<2x256xf32>
    %5 = arith.addf %2, %4 : vector<2x256xf32>
    %c0_5 = arith.constant 0 : index
    %c0_6 = arith.constant 0 : index
    %6 = vector.load %arg5[%c0_5, %c0_6] : memref<2x256xf32, #tpu.memory_space<vmem>>, vector<2x256xf32>
    tpu.vector_store %arg5[%c0_5, %c0_6], %5 {strides = array<i32>} : memref<2x256xf32, #tpu.memory_space<vmem>>, vector<2x256xf32>,
    return
  }
  func.func @transform_0(%arg0: i32, %arg1: i32) -> (i32, i32) {
    %c0_i32 = arith.constant 0 : i32
    %c0_i32_0 = arith.constant 0 : i32
    return %arg0, %c0_i32 : i32, i32
  }
  func.func @transform_1(%arg0: i32, %arg1: i32) -> (i32, i32) {
    %c0_i32 = arith.constant 0 : i32
    %c0_i32_0 = arith.constant 0 : i32
    return %c0_i32, %arg1 : i32, i32
  }
  func.func @transform_2(%arg0: i32, %arg1: i32) -> (i32, i32) {
    %c0_i32 = arith.constant 0 : i32
    %c0_i32_0 = arith.constant 0 : i32
    return %c0_i32, %arg1 : i32, i32
  }
  func.func @transform_3(%arg0: i32, %arg1: i32) -> (i32, i32) {
    %c0_i32 = arith.constant 0 : i32
    return %arg0, %arg1 : i32, i32
  }
}

</mosaic_0001>

<llo_original>
// kernel: tpu_custom_call.1
$region0: #{tpu_custom_call.1}
  #allocation0 [shape = 'u32[]', space=smem, size = 0x4, offset = 0x4, fixed_abs, tag = 'smem constant byte address 0x4 - core index']
  #allocation1 [shape = 'u32[144,128]{1,0:T(1,128)}', space=vmem, size = 0x12000, scoped, tag = 'internal scratch']
  %s0 = inlined_call_operand.hbm [shape: f32[2,256], index: 0, kind: input, shape index: {}]
  %s1 = inlined_call_operand.hbm [shape: f32[256,256], index: 1, kind: input, shape index: {}]
  %s2 = inlined_call_operand.vmem [shape: f32[1,256], index: 2, kind: input, shape index: {}]
  %s3 = inlined_call_operand.hbm [shape: f32[2,256], index: 3, kind: output, shape index: {}]
  %s4 = sld [smem:[#allocation0]]
  $region30: #{tpu_custom_call.1} parent=0
    _
  %s6 = ssub.s32 1, %s4
  %s7 = scalar_select 0, %s6, %s4
  $region1: #{tpu_custom_call.1} parent=0
    #allocation2 [shape = 'u8[2048]{0}', space=vmem, size = 0x800, scoped, tag = 'input window, operand 0, single buffered']
    #allocation3 [shape = 's32[1]{0}', space=sflag, size = 0x4, scoped, tag = 'scoped memory for tpu_custom_call.1']
    #allocation4 [shape = 's32[1]{0}', space=sflag, size = 0x4, scoped, tag = 'scoped memory for tpu_custom_call.1']
    #allocation5 [shape = 'u8[262144]{0}', space=vmem, size = 0x40000, scoped, tag = 'input window, operand 1, single buffered']
    #allocation6 [shape = 's32[1]{0}', space=sflag, size = 0x4, scoped, tag = 'scoped memory for tpu_custom_call.1']
    #allocation7 [shape = 'u8[2048]{0}', space=vmem, size = 0x800, scoped, tag = 'output window, operand 0, single buffered']
    %8 = vsyncpa [#allocation3], 0
    %9 = vsyncpa [#allocation6], 0
    %10 = vsyncpa [#allocation4], 0
    // Predicated region
    $region2: #{tpu_custom_call.1} parent=1 // pred_check
      _
    $region3: #{tpu_custom_call.1} parent=1 // pred_check_branch
      %12 = sbr.rel (0) target = $region5
    $region4: #{tpu_custom_call.1} parent=1 // pred_region
      %s14 = ssub.s32 64, 64
      %15 = vsyncadd [#allocation3], %s14
      %s17 = sshll.u32 [#allocation2], 4
      %s18 = int_to_ptr.vmem [resolvable:$true] %s17
      %20 = dma.hbm_to_vmem [thread:$0]  %s0, 64, %s18, [#allocation3]
    $region5: #{tpu_custom_call.1} parent=1 // pred_fallthru
      _
    // Predicated region
    $region6: #{tpu_custom_call.1} parent=1 // pred_check
      _
    $region7: #{tpu_custom_call.1} parent=1 // pred_check_branch
      %22 = sbr.rel (0) target = $region9
    $region8: #{tpu_custom_call.1} parent=1 // pred_region
      %s24 = ssub.s32 8192, 8192
      %25 = vsyncadd [#allocation6], %s24
      %s26 = sshll.u32 [#allocation5], 4
      %s27 = int_to_ptr.vmem [resolvable:$true] %s26
      %32 = dma.hbm_to_vmem [thread:$0]  %s1, 8192, %s27, [#allocation6], 256, 256, 16
    $region9: #{tpu_custom_call.1} parent=1 // pred_fallthru
      _
    // Predicated region
    $region10: #{tpu_custom_call.1} parent=1 // pred_check
      _
    $region11: #{tpu_custom_call.1} parent=1 // pred_check_branch
      %34 = sbr.rel (0) target = $region13
    $region12: #{tpu_custom_call.1} parent=1 // pred_region
      _
    $region13: #{tpu_custom_call.1} parent=1 // pred_fallthru
      _
    // Predicated region
    $region14: #{tpu_custom_call.1} parent=1 // pred_check
      _
    $region15: #{tpu_custom_call.1} parent=1 // pred_check_branch
      %36 = sbr.rel (0) target = $region17
    $region16: #{tpu_custom_call.1} parent=1 // pred_region
      %37 = dma.done [#allocation3], 64
    $region17: #{tpu_custom_call.1} parent=1 // pred_fallthru
      _
    // Predicated region
    $region18: #{tpu_custom_call.1} parent=1 // pred_check
      _
    $region19: #{tpu_custom_call.1} parent=1 // pred_check_branch
      %39 = sbr.rel (0) target = $region21
    $region20: #{tpu_custom_call.1} parent=1 // pred_region
      %40 = dma.done [#allocation6], 8192
    $region21: #{tpu_custom_call.1} parent=1 // pred_fallthru
      _
    %v41 = vld [vmem:[#allocation2] sm:$0xf]
    %v42 = vld [vmem:[#allocation5] sm:$0xff]
    %v43 = vld [vmem:[#allocation5 + $0x8] sm:$0xff]
    %v44 = vld [vmem:[#allocation5 + $0x10] sm:$0xff]
    %v45 = vld [vmem:[#allocation5 + $0x18] sm:$0xff]
    %v46 = vld [vmem:[#allocation5 + $0x20] sm:$0xff]
    %v47 = vld [vmem:[#allocation5 + $0x28] sm:$0xff]
    %v48 = vld [vmem:[#allocation5 + $0x30] sm:$0xff]
    %v49 = vld [vmem:[#allocation5 + $0x38] sm:$0xff]
    %v50 = vld [vmem:[#allocation5 + $0x40] sm:$0xff]
    %v51 = vld [vmem:[#allocation5 + $0x48] sm:$0xff]
    %v52 = vld [vmem:[#allocation5 + $0x50] sm:$0xff]
    %v53 = vld [vmem:[#allocation5 + $0x58] sm:$0xff]
    %v54 = vld [vmem:[#allocation5 + $0x60] sm:$0xff]
    %v55 = vld [vmem:[#allocation5 + $0x68] sm:$0xff]
    %v56 = vld [vmem:[#allocation5 + $0x70] sm:$0xff]
    %v57 = vld [vmem:[#allocation5 + $0x78] sm:$0xff]
    %v58 = vld [vmem:[#allocation5 + $0x80] sm:$0xff]
    %v59 = vld [vmem:[#allocation5 + $0x88] sm:$0xff]
    %v60 = vld [vmem:[#allocation5 + $0x90] sm:$0xff]
    %v61 = vld [vmem:[#allocation5 + $0x98] sm:$0xff]
    %v62 = vld [vmem:[#allocation5 + $0xa0] sm:$0xff]
    %v63 = vld [vmem:[#allocation5 + $0xa8] sm:$0xff]
    %v64 = vld [vmem:[#allocation5 + $0xb0] sm:$0xff]
    %v65 = vld [vmem:[#allocation5 + $0xb8] sm:$0xff]
    %v66 = vld [vmem:[#allocation5 + $0xc0] sm:$0xff]
    %v67 = vld [vmem:[#allocation5 + $0xc8] sm:$0xff]
    %v68 = vld [vmem:[#allocation5 + $0xd0] sm:$0xff]
    %v69 = vld [vmem:[#allocation5 + $0xd8] sm:$0xff]
    %v70 = vld [vmem:[#allocation5 + $0xe0] sm:$0xff]
    %v71 = vld [vmem:[#allocation5 + $0xe8] sm:$0xff]
    %v72 = vld [vmem:[#allocation5 + $0xf0] sm:$0xff]
    %v73 = vld [vmem:[#allocation5 + $0xf8] sm:$0xff]
    %v74 = vld [vmem:[#allocation5 + $0x100] sm:$0xff]
    %v75 = vld [vmem:[#allocation5 + $0x108] sm:$0xff]
    %v76 = vld [vmem:[#allocation5 + $0x110] sm:$0xff]
    %v77 = vld [vmem:[#allocation5 + $0x118] sm:$0xff]
    %v78 = vld [vmem:[#allocation5 + $0x120] sm:$0xff]
    %v79 = vld [vmem:[#allocation5 + $0x128] sm:$0xff]
    %v80 = vld [vmem:[#allocation5 + $0x130] sm:$0xff]
    %v81 = vld [vmem:[#allocation5 + $0x138] sm:$0xff]
    %v82 = vld [vmem:[#allocation5 + $0x140] sm:$0xff]
    %v83 = vld [vmem:[#allocation5 + $0x148] sm:$0xff]
    %v84 = vld [vmem:[#allocation5 + $0x150] sm:$0xff]
    %v85 = vld [vmem:[#allocation5 + $0x158] sm:$0xff]
    %v86 = vld [vmem:[#allocation5 + $0x160] sm:$0xff]
    %v87 = vld [vmem:[#allocation5 + $0x168] sm:$0xff]
    %v88 = vld [vmem:[#allocation5 + $0x170] sm:$0xff]
    %v89 = vld [vmem:[#allocation5 + $0x178] sm:$0xff]
    %v90 = vld [vmem:[#allocation5 + $0x180] sm:$0xff]
    %v91 = vld [vmem:[#allocation5 + $0x188] sm:$0xff]
    %v92 = vld [vmem:[#allocation5 + $0x190] sm:$0xff]
    %v93 = vld [vmem:[#allocation5 + $0x198] sm:$0xff]
    %v94 = vld [vmem:[#allocation5 + $0x1a0] sm:$0xff]
    %v95 = vld [vmem:[#allocation5 + $0x1a8] sm:$0xff]
    %v96 = vld [vmem:[#allocation5 + $0x1b0] sm:$0xff]
    %v97 = vld [vmem:[#allocation5 + $0x1b8] sm:$0xff]
    %v98 = vld [vmem:[#allocation5 + $0x1c0] sm:$0xff]
    %v99 = vld [vmem:[#allocation5 + $0x1c8] sm:$0xff]
    %v100 = vld [vmem:[#allocation5 + $0x1d0] sm:$0xff]
    %v101 = vld [vmem:[#allocation5 + $0x1d8] sm:$0xff]
    %v102 = vld [vmem:[#allocation5 + $0x1e0] sm:$0xff]
    %v103 = vld [vmem:[#allocation5 + $0x1e8] sm:$0xff]
    %v104 = vld [vmem:[#allocation5 + $0x1f0] sm:$0xff]
    %v105 = vld [vmem:[#allocation5 + $0x1f8] sm:$0xff]
    %v106 = vld [vmem:[%s2] sm:$0x3]
    %v108 = vlaneseq
    %v109 = vshrl.u32 %v108, 7
    %v110 = vsub.s32 0, %v109
    %v111 = vrot.slane %v106, %v110
    %v112 = vlaneseq
    %v113 = vshrl.u32 %v112, 7
    %v114 = vsub.s32 1, %v113
    %v115 = vrot.slane %v106, %v114
    %v120 = vunpack.c.l.s4 1983009808
    %v121 = vunpack.c.0.s8 %v120
    %v122 = vlaneseq
    %v123 = vshrl.u32 %v122, 7
    %v124 = vsub.s32 %v121, %v123
    %v125 = vrot.slane %v41, %v124
    %v126 = vcombine.high %v125, %v125
    %129 = vmatprep.subr.mxu0 %v73
    %130 = vmatpush1.msra.mxu0 %v72
    %131 = vmatprep.subr.mxu0 %v71
    %132 = vmatpush1.msra.mxu0 %v70
    %133 = vmatprep.subr.mxu0 %v69
    %134 = vmatpush1.msra.mxu0 %v68
    %135 = vmatprep.subr.mxu0 %v67
    %136 = vmatpush1.msra.mxu0 %v66
    %137 = vmatprep.subr.mxu0 %v65
    %138 = vmatpush1.msra.mxu0 %v64
    %139 = vmatprep.subr.mxu0 %v63
    %140 = vmatpush1.msra.mxu0 %v62
    %141 = vmatprep.subr.mxu0 %v61
    %142 = vmatpush1.msra.mxu0 %v60
    %143 = vmatprep.subr.mxu0 %v59
    %144 = vmatpush1.msra.mxu0 %v58
    %145 = vmatprep.subr.mxu0 %v57
    %146 = vmatpush1.msra.mxu0 %v56
    %147 = vmatprep.subr.mxu0 %v55
    %148 = vmatpush1.msra.mxu0 %v54
    %149 = vmatprep.subr.mxu0 %v53
    %150 = vmatpush1.msra.mxu0 %v52
    %151 = vmatprep.subr.mxu0 %v51
    %152 = vmatpush1.msra.mxu0 %v50
    %153 = vmatprep.subr.mxu0 %v49
    %154 = vmatpush1.msra.mxu0 %v48
    %155 = vmatprep.subr.mxu0 %v47
    %156 = vmatpush1.msra.mxu0 %v46
    %157 = vmatprep.subr.mxu0 %v45
    %158 = vmatpush1.msra.mxu0 %v44
    %159 = vmatprep.subr.mxu0 %v43
    %160 = vmatpush1.msra.mxu0 %v42
    %161 = vmatprep.subr.mxu0 %v105
    %162 = vmatpush2.msra.mxu0 %v104
    %163 = vmatprep.subr.mxu0 %v103
    %164 = vmatpush2.msra.mxu0 %v102
    %165 = vmatprep.subr.mxu0 %v101
    %166 = vmatpush2.msra.mxu0 %v100
    %167 = vmatprep.subr.mxu0 %v99
    %168 = vmatpush2.msra.mxu0 %v98
    %169 = vmatprep.subr.mxu0 %v97
    %170 = vmatpush2.msra.mxu0 %v96
    %171 = vmatprep.subr.mxu0 %v95
    %172 = vmatpush2.msra.mxu0 %v94
    %173 = vmatprep.subr.mxu0 %v93
    %174 = vmatpush2.msra.mxu0 %v92
    %175 = vmatprep.subr.mxu0 %v91
    %176 = vmatpush2.msra.mxu0 %v90
    %177 = vmatprep.subr.mxu0 %v89
    %178 = vmatpush2.msra.mxu0 %v88
    %179 = vmatprep.subr.mxu0 %v87
    %180 = vmatpush2.msra.mxu0 %v86
    %181 = vmatprep.subr.mxu0 %v85
    %182 = vmatpush2.msra.mxu0 %v84
    %183 = vmatprep.subr.mxu0 %v83
    %184 = vmatpush2.msra.mxu0 %v82
    %185 = vmatprep.subr.mxu0 %v81
    %186 = vmatpush2.msra.mxu0 %v80
    %187 = vmatprep.subr.mxu0 %v79
    %188 = vmatpush2.msra.mxu0 %v78
    %189 = vmatprep.subr.mxu0 %v77
    %190 = vmatpush2.msra.mxu0 %v76
    %191 = vmatprep.subr.mxu0 %v75
    %192 = vmatpush2.msra.mxu0 %v74
    %193 = vmatprep.mubr.f32.mxu0 %v126
    %194 = vmatmul.mubr.f32.gmra.mxu0 %v125
    %v195 = vpop.f32.mrf.mxu0
    %v196 = vadd.f32 %v111, %v195
    %v197 = vpop.f32.mrf.mxu0
    %v198 = vadd.f32 %v115, %v197
    %199 = vdwg.mxu0
    %v202 = vcombine.low %v196, %v198
    %v204 = vunpack.c.l.s4 1983009808
    %v205 = vunpack.c.0.s8 %v204
    %v206 = vlaneseq
    %v207 = vshrl.u32 %v206, 7
    %v208 = vsub.s32 %v205, %v207
    %v209 = vrot.slane %v202, %v208
    %211 = vst [vmem:[#allocation7] sm:$0xf] %v209
    // Predicated region
    $region22: #{tpu_custom_call.1} parent=1 // pred_check
      _
    $region23: #{tpu_custom_call.1} parent=1 // pred_check_branch
      %213 = sbr.rel (0) target = $region25
    $region24: #{tpu_custom_call.1} parent=1 // pred_region
      %s215 = ssub.s32 64, 64
      %216 = vsyncadd [#allocation4], %s215
      %s218 = sshll.u32 [#allocation7], 4
      %s219 = int_to_ptr.vmem [resolvable:$true] %s218
      %221 = dma.vmem_to_hbm [thread:$0]  %s219, 64, %s3, [#allocation4]
    $region25: #{tpu_custom_call.1} parent=1 // pred_fallthru
      _
    // Predicated region
    $region26: #{tpu_custom_call.1} parent=1 // pred_check
      _
    $region27: #{tpu_custom_call.1} parent=1 // pred_check_branch
      %223 = sbr.rel (0) target = $region29
    $region28: #{tpu_custom_call.1} parent=1 // pred_region
      %224 = dma.done [#allocation4], 64
    $region29: #{tpu_custom_call.1} parent=1 // pred_fallthru
      _
    %225 = vsyncpa [#allocation3], 1
    %226 = vsyncpa [#allocation6], 1
    %227 = vsyncpa [#allocation4], 1

// kernel: tpu_custom_call.1
$region0: #{tpu_custom_call.1}
  #allocation0 [shape = 'u32[]', space=smem, size = 0x4, offset = 0x4, fixed_abs, tag = 'smem constant byte address 0x4 - core index']
  #allocation1 [shape = 'u32[144,128]{1,0:T(1,128)}', space=vmem, size = 0x12000, scoped, tag = 'internal scratch']
  %s0 = inlined_call_operand.hbm [shape: f32[2,256], index: 0, kind: input, shape index: {}]
  %s1 = inlined_call_operand.hbm [shape: f32[256,256], index: 1, kind: input, shape index: {}]
  %s2 = inlined_call_operand.vmem [shape: f32[1,256], index: 2, kind: input, shape index: {}]
  %s3 = inlined_call_operand.hbm [shape: f32[2,256], index: 3, kind: output, shape index: {}]
  %s4 = sld [smem:[#allocation0]]
  $region30: #{tpu_custom_call.1} parent=0
    _
  %s6 = ssub.s32 1, %s4
  %s7 = scalar_select 0, %s6, %s4
  $region1: #{tpu_custom_call.1} parent=0
    #allocation2 [shape = 'u8[2048]{0}', space=vmem, size = 0x800, scoped, tag = 'input window, operand 0, single buffered']
    #allocation3 [shape = 's32[1]{0}', space=sflag, size = 0x4, scoped, tag = 'scoped memory for tpu_custom_call.1']
    #allocation4 [shape = 's32[1]{0}', space=sflag, size = 0x4, scoped, tag = 'scoped memory for tpu_custom_call.1']
    #allocation5 [shape = 'u8[262144]{0}', space=vmem, size = 0x40000, scoped, tag = 'input window, operand 1, single buffered']
    #allocation6 [shape = 's32[1]{0}', space=sflag, size = 0x4, scoped, tag = 'scoped memory for tpu_custom_call.1']
    #allocation7 [shape = 'u8[2048]{0}', space=vmem, size = 0x800, scoped, tag = 'output window, operand 0, single buffered']
    %8 = vsyncpa [#allocation3], 0
    %9 = vsyncpa [#allocation6], 0
    %10 = vsyncpa [#allocation4], 0
    // Predicated region
    $region2: #{tpu_custom_call.1} parent=1 // pred_check
      _
    $region3: #{tpu_custom_call.1} parent=1 // pred_check_branch
      %12 = sbr.rel (0) target = $region5
    $region4: #{tpu_custom_call.1} parent=1 // pred_region
      %s14 = ssub.s32 64, 64
      %15 = vsyncadd [#allocation3], %s14
      %s17 = sshll.u32 [#allocation2], 4
      %s18 = int_to_ptr.vmem [resolvable:$true] %s17
      %20 = dma.hbm_to_vmem [thread:$0]  %s0, 64, %s18, [#allocation3]
    $region5: #{tpu_custom_call.1} parent=1 // pred_fallthru
      _
    // Predicated region
    $region6: #{tpu_custom_call.1} parent=1 // pred_check
      _
    $region7: #{tpu_custom_call.1} parent=1 // pred_check_branch
      %22 = sbr.rel (0) target = $region9
    $region8: #{tpu_custom_call.1} parent=1 // pred_region
      %s24 = ssub.s32 8192, 8192
      %25 = vsyncadd [#allocation6], %s24
      %s26 = sshll.u32 [#allocation5], 4
      %s27 = int_to_ptr.vmem [resolvable:$true] %s26
      %32 = dma.hbm_to_vmem [thread:$0]  %s1, 8192, %s27, [#allocation6], 256, 256, 16
    $region9: #{tpu_custom_call.1} parent=1 // pred_fallthru
      _
    // Predicated region
    $region10: #{tpu_custom_call.1} parent=1 // pred_check
      _
    $region11: #{tpu_custom_call.1} parent=1 // pred_check_branch
      %34 = sbr.rel (0) target = $region13
    $region12: #{tpu_custom_call.1} parent=1 // pred_region
      _
    $region13: #{tpu_custom_call.1} parent=1 // pred_fallthru
      _
    // Predicated region
    $region14: #{tpu_custom_call.1} parent=1 // pred_check
      _
    $region15: #{tpu_custom_call.1} parent=1 // pred_check_branch
      %36 = sbr.rel (0) target = $region17
    $region16: #{tpu_custom_call.1} parent=1 // pred_region
      %37 = dma.done [#allocation3], 64
    $region17: #{tpu_custom_call.1} parent=1 // pred_fallthru
      _
    // Predicated region
    $region18: #{tpu_custom_call.1} parent=1 // pred_check
      _
    $region19: #{tpu_custom_call.1} parent=1 // pred_check_branch
      %39 = sbr.rel (0) target = $region21
    $region20: #{tpu_custom_call.1} parent=1 // pred_region
      %40 = dma.done [#allocation6], 8192
    $region21: #{tpu_custom_call.1} parent=1 // pred_fallthru
      _
    %v41 = vld [vmem:[#allocation2] sm:$0xf]
    %v42 = vld [vmem:[#allocation5] sm:$0xff]
    %v43 = vld [vmem:[#allocation5 + $0x8] sm:$0xff]
    %v44 = vld [vmem:[#allocation5 + $0x10] sm:$0xff]
    %v45 = vld [vmem:[#allocation5 + $0x18] sm:$0xff]
    %v46 = vld [vmem:[#allocation5 + $0x20] sm:$0xff]
    %v47 = vld [vmem:[#allocation5 + $0x28] sm:$0xff]
    %v48 = vld [vmem:[#allocation5 + $0x30] sm:$0xff]
    %v49 = vld [vmem:[#allocation5 + $0x38] sm:$0xff]
    %v50 = vld [vmem:[#allocation5 + $0x40] sm:$0xff]
    %v51 = vld [vmem:[#allocation5 + $0x48] sm:$0xff]
    %v52 = vld [vmem:[#allocation5 + $0x50] sm:$0xff]
    %v53 = vld [vmem:[#allocation5 + $0x58] sm:$0xff]
    %v54 = vld [vmem:[#allocation5 + $0x60] sm:$0xff]
    %v55 = vld [vmem:[#allocation5 + $0x68] sm:$0xff]
    %v56 = vld [vmem:[#allocation5 + $0x70] sm:$0xff]
    %v57 = vld [vmem:[#allocation5 + $0x78] sm:$0xff]
    %v58 = vld [vmem:[#allocation5 + $0x80] sm:$0xff]
    %v59 = vld [vmem:[#allocation5 + $0x88] sm:$0xff]
    %v60 = vld [vmem:[#allocation5 + $0x90] sm:$0xff]
    %v61 = vld [vmem:[#allocation5 + $0x98] sm:$0xff]
    %v62 = vld [vmem:[#allocation5 + $0xa0] sm:$0xff]
    %v63 = vld [vmem:[#allocation5 + $0xa8] sm:$0xff]
    %v64 = vld [vmem:[#allocation5 + $0xb0] sm:$0xff]
    %v65 = vld [vmem:[#allocation5 + $0xb8] sm:$0xff]
    %v66 = vld [vmem:[#allocation5 + $0xc0] sm:$0xff]
    %v67 = vld [vmem:[#allocation5 + $0xc8] sm:$0xff]
    %v68 = vld [vmem:[#allocation5 + $0xd0] sm:$0xff]
    %v69 = vld [vmem:[#allocation5 + $0xd8] sm:$0xff]
    %v70 = vld [vmem:[#allocation5 + $0xe0] sm:$0xff]
    %v71 = vld [vmem:[#allocation5 + $0xe8] sm:$0xff]
    %v72 = vld [vmem:[#allocation5 + $0xf0] sm:$0xff]
    %v73 = vld [vmem:[#allocation5 + $0xf8] sm:$0xff]
    %v74 = vld [vmem:[#allocation5 + $0x100] sm:$0xff]
    %v75 = vld [vmem:[#allocation5 + $0x108] sm:$0xff]
    %v76 = vld [vmem:[#allocation5 + $0x110] sm:$0xff]
    %v77 = vld [vmem:[#allocation5 + $0x118] sm:$0xff]
    %v78 = vld [vmem:[#allocation5 + $0x120] sm:$0xff]
    %v79 = vld [vmem:[#allocation5 + $0x128] sm:$0xff]
    %v80 = vld [vmem:[#allocation5 + $0x130] sm:$0xff]
    %v81 = vld [vmem:[#allocation5 + $0x138] sm:$0xff]
    %v82 = vld [vmem:[#allocation5 + $0x140] sm:$0xff]
    %v83 = vld [vmem:[#allocation5 + $0x148] sm:$0xff]
    %v84 = vld [vmem:[#allocation5 + $0x150] sm:$0xff]
    %v85 = vld [vmem:[#allocation5 + $0x158] sm:$0xff]
    %v86 = vld [vmem:[#allocation5 + $0x160] sm:$0xff]
    %v87 = vld [vmem:[#allocation5 + $0x168] sm:$0xff]
    %v88 = vld [vmem:[#allocation5 + $0x170] sm:$0xff]
    %v89 = vld [vmem:[#allocation5 + $0x178] sm:$0xff]
    %v90 = vld [vmem:[#allocation5 + $0x180] sm:$0xff]
    %v91 = vld [vmem:[#allocation5 + $0x188] sm:$0xff]
    %v92 = vld [vmem:[#allocation5 + $0x190] sm:$0xff]
    %v93 = vld [vmem:[#allocation5 + $0x198] sm:$0xff]
    %v94 = vld [vmem:[#allocation5 + $0x1a0] sm:$0xff]
    %v95 = vld [vmem:[#allocation5 + $0x1a8] sm:$0xff]
    %v96 = vld [vmem:[#allocation5 + $0x1b0] sm:$0xff]
    %v97 = vld [vmem:[#allocation5 + $0x1b8] sm:$0xff]
    %v98 = vld [vmem:[#allocation5 + $0x1c0] sm:$0xff]
    %v99 = vld [vmem:[#allocation5 + $0x1c8] sm:$0xff]
    %v100 = vld [vmem:[#allocation5 + $0x1d0] sm:$0xff]
    %v101 = vld [vmem:[#allocation5 + $0x1d8] sm:$0xff]
    %v102 = vld [vmem:[#allocation5 + $0x1e0] sm:$0xff]
    %v103 = vld [vmem:[#allocation5 + $0x1e8] sm:$0xff]
    %v104 = vld [vmem:[#allocation5 + $0x1f0] sm:$0xff]
    %v105 = vld [vmem:[#allocation5 + $0x1f8] sm:$0xff]
    %v106 = vld [vmem:[%s2] sm:$0x3]
    %v108 = vlaneseq
    %v109 = vshrl.u32 %v108, 7
    %v110 = vsub.s32 0, %v109
    %v111 = vrot.slane %v106, %v110
    %v112 = vlaneseq
    %v113 = vshrl.u32 %v112, 7
    %v114 = vsub.s32 1, %v113
    %v115 = vrot.slane %v106, %v114
    %v120 = vunpack.c.l.s4 1983009808
    %v121 = vunpack.c.0.s8 %v120
    %v122 = vlaneseq
    %v123 = vshrl.u32 %v122, 7
    %v124 = vsub.s32 %v121, %v123
    %v125 = vrot.slane %v41, %v124
    %v126 = vcombine.high %v125, %v125
    %129 = vmatprep.subr.mxu0 %v73
    %130 = vmatpush1.msra.mxu0 %v72
    %131 = vmatprep.subr.mxu0 %v71
    %132 = vmatpush1.msra.mxu0 %v70
    %133 = vmatprep.subr.mxu0 %v69
    %134 = vmatpush1.msra.mxu0 %v68
    %135 = vmatprep.subr.mxu0 %v67
    %136 = vmatpush1.msra.mxu0 %v66
    %137 = vmatprep.subr.mxu0 %v65
    %138 = vmatpush1.msra.mxu0 %v64
    %139 = vmatprep.subr.mxu0 %v63
    %140 = vmatpush1.msra.mxu0 %v62
    %141 = vmatprep.subr.mxu0 %v61
    %142 = vmatpush1.msra.mxu0 %v60
    %143 = vmatprep.subr.mxu0 %v59
    %144 = vmatpush1.msra.mxu0 %v58
    %145 = vmatprep.subr.mxu0 %v57
    %146 = vmatpush1.msra.mxu0 %v56
    %147 = vmatprep.subr.mxu0 %v55
    %148 = vmatpush1.msra.mxu0 %v54
    %149 = vmatprep.subr.mxu0 %v53
    %150 = vmatpush1.msra.mxu0 %v52
    %151 = vmatprep.subr.mxu0 %v51
    %152 = vmatpush1.msra.mxu0 %v50
    %153 = vmatprep.subr.mxu0 %v49
    %154 = vmatpush1.msra.mxu0 %v48
    %155 = vmatprep.subr.mxu0 %v47
    %156 = vmatpush1.msra.mxu0 %v46
    %157 = vmatprep.subr.mxu0 %v45
    %158 = vmatpush1.msra.mxu0 %v44
    %159 = vmatprep.subr.mxu0 %v43
    %160 = vmatpush1.msra.mxu0 %v42
    %161 = vmatprep.subr.mxu0 %v105
    %162 = vmatpush2.msra.mxu0 %v104
    %163 = vmatprep.subr.mxu0 %v103
    %164 = vmatpush2.msra.mxu0 %v102
    %165 = vmatprep.subr.mxu0 %v101
    %166 = vmatpush2.msra.mxu0 %v100
    %167 = vmatprep.subr.mxu0 %v99
    %168 = vmatpush2.msra.mxu0 %v98
    %169 = vmatprep.subr.mxu0 %v97
    %170 = vmatpush2.msra.mxu0 %v96
    %171 = vmatprep.subr.mxu0 %v95
    %172 = vmatpush2.msra.mxu0 %v94
    %173 = vmatprep.subr.mxu0 %v93
    %174 = vmatpush2.msra.mxu0 %v92
    %175 = vmatprep.subr.mxu0 %v91
    %176 = vmatpush2.msra.mxu0 %v90
    %177 = vmatprep.subr.mxu0 %v89
    %178 = vmatpush2.msra.mxu0 %v88
    %179 = vmatprep.subr.mxu0 %v87
    %180 = vmatpush2.msra.mxu0 %v86
    %181 = vmatprep.subr.mxu0 %v85
    %182 = vmatpush2.msra.mxu0 %v84
    %183 = vmatprep.subr.mxu0 %v83
    %184 = vmatpush2.msra.mxu0 %v82
    %185 = vmatprep.subr.mxu0 %v81
    %186 = vmatpush2.msra.mxu0 %v80
    %187 = vmatprep.subr.mxu0 %v79
    %188 = vmatpush2.msra.mxu0 %v78
    %189 = vmatprep.subr.mxu0 %v77
    %190 = vmatpush2.msra.mxu0 %v76
    %191 = vmatprep.subr.mxu0 %v75
    %192 = vmatpush2.msra.mxu0 %v74
    %193 = vmatprep.mubr.f32.mxu0 %v126
    %194 = vmatmul.mubr.f32.gmra.mxu0 %v125
    %v195 = vpop.f32.mrf.mxu0
    %v196 = vadd.f32 %v111, %v195
    %v197 = vpop.f32.mrf.mxu0
    %v198 = vadd.f32 %v115, %v197
    %199 = vdwg.mxu0
    %v202 = vcombine.low %v196, %v198
    %v204 = vunpack.c.l.s4 1983009808
    %v205 = vunpack.c.0.s8 %v204
    %v206 = vlaneseq
    %v207 = vshrl.u32 %v206, 7
    %v208 = vsub.s32 %v205, %v207
    %v209 = vrot.slane %v202, %v208
    %211 = vst [vmem:[#allocation7] sm:$0xf] %v209
    // Predicated region
    $region22: #{tpu_custom_call.1} parent=1 // pred_check
      _
    $region23: #{tpu_custom_call.1} parent=1 // pred_check_branch
      %213 = sbr.rel (0) target = $region25
    $region24: #{tpu_custom_call.1} parent=1 // pred_region
      %s215 = ssub.s32 64, 64
      %216 = vsyncadd [#allocation4], %s215
      %s218 = sshll.u32 [#allocation7], 4
      %s219 = int_to_ptr.vmem [resolvable:$true] %s218
      %221 = dma.vmem_to_hbm [thread:$0]  %s219, 64, %s3, [#allocation4]
    $region25: #{tpu_custom_call.1} parent=1 // pred_fallthru
      _
    // Predicated region
    $region26: #{tpu_custom_call.1} parent=1 // pred_check
      _
    $region27: #{tpu_custom_call.1} parent=1 // pred_check_branch
      %223 = sbr.rel (0) target = $region29
    $region28: #{tpu_custom_call.1} parent=1 // pred_region
      %224 = dma.done [#allocation4], 64
    $region29: #{tpu_custom_call.1} parent=1 // pred_fallthru
      _
    %225 = vsyncpa [#allocation3], 1
    %226 = vsyncpa [#allocation6], 1
    %227 = vsyncpa [#allocation4], 1

</llo_original>
